<compile_context>
chip_gen: v5e
topology: v5e:2x2
jax: 0.10.0
libtpu: 0.0.40
codegen_flags: <defaults>
</compile_context>

<pallas_src>
import jax
import jax.numpy as jnp
from functools import partial
from jax.experimental import pallas as pl
from jax.experimental.pallas import tpu as pltpu

NEG_SLOPE = 0.02   # nn.LeakyReLU(negative_slope=0.02)
LN_EPS = 1e-5      # nn.LayerNorm default eps
LANE = 128         # TPU lane width


def _round_up(n, m):
    return ((n + m - 1) // m) * m


def _bf16_elementwise_ok():
    """bf16 VALU exists on v6e/v7x; keep the f32 elementwise path elsewhere."""
    try:
        kind = jax.devices()[0].device_kind.lower()
    except Exception:
        return False
    return ("v6" in kind) or ("v7" in kind) or ("trillium" in kind)


def _leaky_to_bf16(x, use_bf16_vpu):
    """LeakyReLU(0.02) returning a bf16 operand for the next MXU matmul.

    max(x, slope*x) == leaky_relu(x) for 0 < slope < 1 (mul+max, no select).
    On v6e/v7x the activation runs on bf16 vregs (2x elements/vreg); on v5e
    (no bf16 VALU) it stays f32 and only the final cast is bf16.
    """
    if use_bf16_vpu:
        xb = x.astype(jnp.bfloat16)
        return jnp.maximum(xb, jnp.asarray(NEG_SLOPE, jnp.bfloat16) * xb)
    return jnp.maximum(x, NEG_SLOPE * x).astype(jnp.bfloat16)


def mlp_kernel(num_layers, d_valid, use_bf16_vpu,
               x_ref, w_in_ref, ws_ref, w_out_ref, vec_ref, b_out_ref, o_ref):
    """Whole MLP forward for one (tb, in_dim) batch tile.

    The hidden feature dim is zero-padded to a multiple of 128; padded hidden
    columns stay exactly zero through every layer (weights/gamma/beta/bias are
    zero-padded). Matmul operands are bf16, accumulation is f32 (MXU);
    LayerNorm math stays f32.
    """
    vecs = vec_ref[...]                               # (1 + 3*L, base_pad) f32

    # ----- in_fc: (tb, in_dim) bf16 @ (in_dim, base_pad) bf16 -> f32 -----
    h = jnp.dot(x_ref[...], w_in_ref[...],
                preferred_element_type=jnp.float32) + vecs[0:1, :]

    d_pad = h.shape[-1]
    pad_cols = d_pad - d_valid
    inv_d = 1.0 / d_valid

    # ----- num_layers x [LayerNorm -> LeakyReLU -> Dropout(p=0) -> Linear] -----
    for li in range(num_layers):
        gamma = vecs[1 + 3 * li: 2 + 3 * li, :]
        beta = vecs[2 + 3 * li: 3 + 3 * li, :]
        bias = vecs[3 + 3 * li: 4 + 3 * li, :]

        # LayerNorm over the d_valid real columns (biased variance, as torch).
        # Padded columns of h are exactly 0 -> their diff equals -mu, so their
        # contribution to sum(diff^2) is exactly pad_cols*mu^2; subtract that
        # (tb,1)-shaped correction instead of masking every element.
        mu = jnp.sum(h, axis=-1, keepdims=True) * inv_d
        diff = h - mu
        ssq = jnp.sum(diff * diff, axis=-1, keepdims=True)
        if pad_cols:
            ssq = ssq - pad_cols * (mu * mu)
        hn = diff * jax.lax.rsqrt(ssq * inv_d + LN_EPS) * gamma + beta

        ha = _leaky_to_bf16(hn, use_bf16_vpu)
        h = jnp.dot(ha, ws_ref[li], preferred_element_type=jnp.float32) + bias

    # ----- out_fc: LeakyReLU -> Linear (narrow out_dim columns, f32) -----
    out = jnp.dot(_leaky_to_bf16(h, use_bf16_vpu), w_out_ref[...],
                  preferred_element_type=jnp.float32) + b_out_ref[...]
    o_ref[...] = out.astype(o_ref.dtype)


def init_params(key, in_dim, base_dim, out_dim, num_layers):
    """Deterministic synthetic parameters (f32). Weights stored as (in, out)."""
    ks = jax.random.split(key, 2 + 2 * num_layers + 2)
    p = {}
    p["w_in"] = 0.1 * jax.random.normal(ks[0], (in_dim, base_dim), jnp.float32)
    p["b_in"] = 0.1 * jax.random.normal(ks[1], (1, base_dim), jnp.float32)
    p["layers"] = []
    for i in range(num_layers):
        gamma = jnp.ones((1, base_dim), jnp.float32)
        beta = jnp.zeros((1, base_dim), jnp.float32)
        w = 0.1 * jax.random.normal(ks[2 + 2 * i], (base_dim, base_dim), jnp.float32)
        b = 0.1 * jax.random.normal(ks[3 + 2 * i], (1, base_dim), jnp.float32)
        p["layers"].append((gamma, beta, w, b))
    p["w_out"] = 0.1 * jax.random.normal(ks[-2], (base_dim, out_dim), jnp.float32)
    p["b_out"] = 0.1 * jax.random.normal(ks[-1], (1, out_dim), jnp.float32)
    return p


def pack_params_for_tpu(params):
    """Pad the hidden dim to the lane width, cast weights to bf16, and pack all
    (1, base_dim) vectors (b_in, then per-layer gamma/beta/bias) into a single
    resident f32 array. Input rows of w_in and output columns of w_out keep
    their native (unpadded) widths so x / y are streamed at full density."""
    in_dim, base_dim = params["w_in"].shape
    out_dim = params["w_out"].shape[1]
    base_pad = _round_up(base_dim, LANE)

    def pad2(a, rows, cols):
        return jnp.pad(a, ((0, rows - a.shape[0]), (0, cols - a.shape[1])))

    w_in = pad2(params["w_in"], in_dim, base_pad).astype(jnp.bfloat16)     # (in_dim, base_pad)
    w_stack = jnp.stack(
        [pad2(w, base_pad, base_pad) for (_, _, w, _) in params["layers"]]
    ).astype(jnp.bfloat16)                                                 # (L, base_pad, base_pad)
    w_out = pad2(params["w_out"], base_pad, out_dim).astype(jnp.bfloat16)  # (base_pad, out_dim)

    rows = [pad2(params["b_in"], 1, base_pad)]
    for (g, be, _, b) in params["layers"]:
        rows += [pad2(g, 1, base_pad), pad2(be, 1, base_pad), pad2(b, 1, base_pad)]
    vecs = jnp.concatenate(rows, axis=0).astype(jnp.float32)               # (1+3L, base_pad)
    b_out = params["b_out"].astype(jnp.float32)                            # (1, out_dim)

    return dict(w_in=w_in, w_stack=w_stack, w_out=w_out, vecs=vecs,
                b_out=b_out, dims=(in_dim, base_pad, out_dim))


def mlp_forward(x, params, num_layers, tb=None, bf16_act=None):
    B, in_dim = x.shape
    base_dim = params["w_in"].shape[1]
    out_dim = params["w_out"].shape[1]
    assert num_layers >= 1
    if bf16_act is None:
        bf16_act = _bf16_elementwise_ok()

    packed = pack_params_for_tpu(params)
    _, base_pad, _ = packed["dims"]

    # Batch tile: one grid step for small batches; for larger batches 512-1024
    # row tiles while keeping >= 2 grid steps so the "parallel" batch axis can
    # shard across v7x's two TensorCores. Multiple of 16 for bf16 packing.
    if tb is None:
        if B <= 256:
            tb = max(16, _round_up(B, 16))
        else:
            tb = min(1024, _round_up(-(-B // 2), 16))
    tb = max(16, _round_up(tb, 16))
    b_pad = _round_up(B, tb)
    grid = (b_pad // tb,)

    # Stream x as bf16 at its native feature width (no lane padding, no extra
    # HBM pass); only the batch dim is padded to the tile size.
    x_pad = jnp.pad(x.astype(jnp.bfloat16), ((0, b_pad - B), (0, 0)))

    def const_spec(shape):
        n = len(shape)
        return pl.BlockSpec(shape, lambda i, _n=n: (0,) * _n)

    in_specs = [
        pl.BlockSpec((tb, in_dim), lambda i: (i, 0)),
        const_spec(packed["w_in"].shape),
        const_spec(packed["w_stack"].shape),
        const_spec(packed["w_out"].shape),
        const_spec(packed["vecs"].shape),
        const_spec(packed["b_out"].shape),
    ]

    # Realistic VMEM budget (never asks for all of v7x's 64 MiB per-TC VMEM).
    param_bytes = sum(int(packed[k].nbytes)
                      for k in ("w_in", "w_stack", "w_out", "vecs", "b_out"))
    io_tile_bytes = 2 * tb * (in_dim * 2 + out_dim * 4)   # double-buffered I/O tiles
    interm_bytes = 16 * tb * base_pad * 4                 # generous in-kernel temporaries
    vmem_bytes = param_bytes * 2 + io_tile_bytes + interm_bytes + (4 << 20)
    vmem_bytes = int(min(max(vmem_bytes, 16 << 20), 32 << 20))

    flops = 2 * b_pad * base_pad * (in_dim + num_layers * base_pad + out_dim)
    bytes_accessed = int(x_pad.nbytes) + b_pad * out_dim * 4 + param_bytes
    cost = pl.CostEstimate(flops=flops,
                           transcendentals=b_pad * num_layers,
                           bytes_accessed=bytes_accessed)

    y_pad = pl.pallas_call(
        partial(mlp_kernel, num_layers, base_dim, bf16_act),
        out_shape=jax.ShapeDtypeStruct((b_pad, out_dim), jnp.float32),
        grid_spec=pltpu.PrefetchScalarGridSpec(
            num_scalar_prefetch=0,
            grid=grid,
            in_specs=in_specs,
            out_specs=pl.BlockSpec((tb, out_dim), lambda i: (i, 0)),
        ),
        compiler_params=pltpu.CompilerParams(
            dimension_semantics=("parallel",),
            vmem_limit_bytes=vmem_bytes,
        ),
        cost_estimate=cost,
    )(x_pad, packed["w_in"], packed["w_stack"], packed["w_out"],
      packed["vecs"], packed["b_out"])

    return y_pad[:B]


def mlp_reference(x, params, match_bf16=True, bf16_act=False):
    """Pure-JAX reference. match_bf16 casts matmul operands to bf16 (f32
    accumulation) and bf16_act mirrors the kernel's activation dtype so the
    comparison isolates kernel bugs rather than precision policy."""
    def mm(a, w):
        if match_bf16:
            return jnp.dot(a.astype(jnp.bfloat16), w.astype(jnp.bfloat16),
                           preferred_element_type=jnp.float32)
        return jnp.dot(a, w)

    def act(a):
        if bf16_act:
            ab = a.astype(jnp.bfloat16)
            return jnp.maximum(ab, jnp.asarray(NEG_SLOPE, jnp.bfloat16) * ab)
        return jnp.maximum(a, NEG_SLOPE * a)

    h = mm(x, params["w_in"]) + params["b_in"]
    for (g, be, w, b) in params["layers"]:
        mu = jnp.mean(h, axis=-1, keepdims=True)
        var = jnp.mean((h - mu) ** 2, axis=-1, keepdims=True)
        hn = (h - mu) * jax.lax.rsqrt(var + LN_EPS) * g + be
        h = mm(act(hn), w) + b
    return mm(act(h), params["w_out"]) + params["b_out"]


if __name__ == "__main__":
    # small synthetic config: MLP(in_dim=4, base_dim=32, out_dim=None,
    #                             multiplier=1, num_layers=3, drop_rate=0.0)
    IN_DIM, BASE_DIM, NUM_LAYERS = 4, 32, 3
    OUT_DIM = IN_DIM  # out_dim = out_dim or in_dim

    key = jax.random.PRNGKey(0)
    k_x, k_p, k_x2 = jax.random.split(key, 3)
    params = init_params(k_p, IN_DIM, BASE_DIM, OUT_DIM, NUM_LAYERS)
    bf16_act = _bf16_elementwise_ok()

    # Small batch (single grid step).
    x = jax.random.normal(k_x, (16, IN_DIM), jnp.float32)
    out = jax.block_until_ready(mlp_forward(x, params, NUM_LAYERS, bf16_act=bf16_act))
    ref = mlp_reference(x, params, match_bf16=True, bf16_act=bf16_act)
    assert out.shape == (16, OUT_DIM)
    assert jnp.allclose(out, ref, atol=2e-3, rtol=2e-3), "mismatch vs reference (B=16)"

    # Batch that exercises a multi-step grid + batch-row padding.
    x2 = jax.random.normal(k_x2, (300, IN_DIM), jnp.float32)
    out2 = jax.block_until_ready(mlp_forward(x2, params, NUM_LAYERS, bf16_act=bf16_act))
    ref2 = mlp_reference(x2, params, match_bf16=True, bf16_act=bf16_act)
    assert out2.shape == (300, OUT_DIM)
    assert jnp.allclose(out2, ref2, atol=2e-3, rtol=2e-3), "mismatch vs reference (B=300)"

    print("KERNEL_OK")
</pallas_src>

<mosaic_0001>
module attributes {stable_mosaic.version = 11 : i64} {
  func.func @mlp_kernel(%arg0: i32, %arg1: memref<16x4xbf16, #tpu.memory_space<vmem>>, %arg2: memref<4x128xbf16, #tpu.memory_space<vmem>>, %arg3: memref<3x128x128xbf16, #tpu.memory_space<vmem>>, %arg4: memref<128x4xbf16, #tpu.memory_space<vmem>>, %arg5: memref<10x128xf32, #tpu.memory_space<vmem>>, %arg6: memref<1x4xf32, #tpu.memory_space<vmem>>, %arg7: memref<16x4xf32, #tpu.memory_space<vmem>>) attributes {dimension_semantics = [#tpu.dimension_semantics<parallel>], iteration_bounds = array<i64: 1>, scalar_prefetch = 0 : i64, scratch_operands = 0 : i64, tpu.core_type = #tpu.core_type<tc>, window_params = [{transform_indices = @transform_0, window_bounds = array<i64: 16, 4>}, {pipeline_mode = #tpu.pipeline_mode<synchronous>, transform_indices = @transform_1, window_bounds = array<i64: 4, 128>}, {pipeline_mode = #tpu.pipeline_mode<synchronous>, transform_indices = @transform_2, window_bounds = array<i64: 3, 128, 128>}, {pipeline_mode = #tpu.pipeline_mode<synchronous>, transform_indices = @transform_3, window_bounds = array<i64: 128, 4>}, {pipeline_mode = #tpu.pipeline_mode<synchronous>, transform_indices = @transform_4, window_bounds = array<i64: 10, 128>}, {pipeline_mode = #tpu.pipeline_mode<synchronous>, transform_indices = @transform_5, window_bounds = array<i64: 1, 4>}, {transform_indices = @transform_6, window_bounds = array<i64: 16, 4>}]} {
    %c0 = arith.constant 0 : index
    %c0_0 = arith.constant 0 : index
    %0 = vector.load %arg5[%c0, %c0_0] : memref<10x128xf32, #tpu.memory_space<vmem>>, vector<10x128xf32>
    %c0_1 = arith.constant 0 : index
    %c0_2 = arith.constant 0 : index
    %1 = vector.load %arg1[%c0_1, %c0_2] : memref<16x4xbf16, #tpu.memory_space<vmem>>, vector<16x4xbf16>
    %c0_3 = arith.constant 0 : index
    %c0_4 = arith.constant 0 : index
    %2 = vector.load %arg2[%c0_3, %c0_4] : memref<4x128xbf16, #tpu.memory_space<vmem>>, vector<4x128xbf16>
    %cst = arith.constant dense<0.000000e+00> : vector<16x128xf32>
    %3 = tpu.matmul %1, %2, %cst {dimension_numbers = #tpu.dot_dimension_numbers<[1], [0], [0], [1], [0, 0, 1, 1], [], []>} : vector<16x4xbf16>, vector<4x128xbf16>, vector<16x128xf32> -> vector<16x128xf32>
    %4 = vector.extract_strided_slice %0 {offsets = [0, 0], sizes = [1, 128], strides = [1, 1]} : vector<10x128xf32> to vector<1x128xf32>
    %5 = vector.broadcast %4 : vector<1x128xf32> to vector<16x128xf32>
    %6 = arith.addf %3, %5 : vector<16x128xf32>
    %7 = vector.extract_strided_slice %0 {offsets = [1, 0], sizes = [1, 128], strides = [1, 1]} : vector<10x128xf32> to vector<1x128xf32>
    %8 = vector.extract_strided_slice %0 {offsets = [2, 0], sizes = [1, 128], strides = [1, 1]} : vector<10x128xf32> to vector<1x128xf32>
    %9 = vector.extract_strided_slice %0 {offsets = [3, 0], sizes = [1, 128], strides = [1, 1]} : vector<10x128xf32> to vector<1x128xf32>
    %cst_5 = arith.constant dense<0.000000e+00> : vector<16xf32>
    %10 = vector.multi_reduction <add>, %6, %cst_5 [1] : vector<16x128xf32> to vector<16xf32>
    %11 = vector.shape_cast %10 : vector<16xf32> to vector<16x1xf32>
    %cst_6 = arith.constant 3.125000e-02 : f32
    %12 = vector.broadcast %cst_6 : f32 to vector<16x1xf32>
    %13 = arith.mulf %11, %12 : vector<16x1xf32>
    %14 = vector.broadcast %13 : vector<16x1xf32> to vector<16x128xf32>
    %15 = arith.subf %6, %14 : vector<16x128xf32>
    %16 = arith.mulf %15, %15 : vector<16x128xf32>
    %cst_7 = arith.constant dense<0.000000e+00> : vector<16xf32>
    %17 = vector.multi_reduction <add>, %16, %cst_7 [1] : vector<16x128xf32> to vector<16xf32>
    %18 = vector.shape_cast %17 : vector<16xf32> to vector<16x1xf32>
    %19 = arith.mulf %13, %13 : vector<16x1xf32>
    %cst_8 = arith.constant 9.600000e+01 : f32
    %20 = vector.broadcast %cst_8 : f32 to vector<16x1xf32>
    %21 = arith.mulf %20, %19 : vector<16x1xf32>
    %22 = arith.subf %18, %21 : vector<16x1xf32>
    %cst_9 = arith.constant 3.125000e-02 : f32
    %23 = vector.broadcast %cst_9 : f32 to vector<16x1xf32>
    %24 = arith.mulf %22, %23 : vector<16x1xf32>
    %cst_10 = arith.constant 9.99999974E-6 : f32
    %25 = vector.broadcast %cst_10 : f32 to vector<16x1xf32>
    %26 = arith.addf %24, %25 : vector<16x1xf32>
    %27 = math.rsqrt %26 : vector<16x1xf32>
    %28 = vector.broadcast %27 : vector<16x1xf32> to vector<16x128xf32>
    %29 = arith.mulf %15, %28 : vector<16x128xf32>
    %30 = vector.broadcast %7 : vector<1x128xf32> to vector<16x128xf32>
    %31 = arith.mulf %29, %30 : vector<16x128xf32>
    %32 = vector.broadcast %8 : vector<1x128xf32> to vector<16x128xf32>
    %33 = arith.addf %31, %32 : vector<16x128xf32>
    %cst_11 = arith.constant 2.000000e-02 : f32
    %34 = vector.broadcast %cst_11 : f32 to vector<16x128xf32>
    %35 = arith.mulf %34, %33 : vector<16x128xf32>
    %36 = arith.maximumf %33, %35 : vector<16x128xf32>
    %37 = arith.truncf %36 : vector<16x128xf32> to vector<16x128xbf16>
    %c0_12 = arith.constant 0 : index
    %c0_13 = arith.constant 0 : index
    %c0_14 = arith.constant 0 : index
    %38 = vector.load %arg3[%c0_12, %c0_13, %c0_14] : memref<3x128x128xbf16, #tpu.memory_space<vmem>>, vector<1x128x128xbf16>
    %39 = vector.shape_cast %38 : vector<1x128x128xbf16> to vector<128x128xbf16>
    %cst_15 = arith.constant dense<0.000000e+00> : vector<16x128xf32>
    %40 = tpu.matmul %37, %39, %cst_15 {dimension_numbers = #tpu.dot_dimension_numbers<[1], [0], [0], [1], [0, 0, 1, 1], [], []>} : vector<16x128xbf16>, vector<128x128xbf16>, vector<16x128xf32> -> vector<16x128xf32>
    %41 = vector.broadcast %9 : vector<1x128xf32> to vector<16x128xf32>
    %42 = arith.addf %40, %41 : vector<16x128xf32>
    %43 = vector.extract_strided_slice %0 {offsets = [4, 0], sizes = [1, 128], strides = [1, 1]} : vector<10x128xf32> to vector<1x128xf32>
    %44 = vector.extract_strided_slice %0 {offsets = [5, 0], sizes = [1, 128], strides = [1, 1]} : vector<10x128xf32> to vector<1x128xf32>
    %45 = vector.extract_strided_slice %0 {offsets = [6, 0], sizes = [1, 128], strides = [1, 1]} : vector<10x128xf32> to vector<1x128xf32>
    %cst_16 = arith.constant dense<0.000000e+00> : vector<16xf32>
    %46 = vector.multi_reduction <add>, %42, %cst_16 [1] : vector<16x128xf32> to vector<16xf32>
    %47 = vector.shape_cast %46 : vector<16xf32> to vector<16x1xf32>
    %cst_17 = arith.constant 3.125000e-02 : f32
    %48 = vector.broadcast %cst_17 : f32 to vector<16x1xf32>
    %49 = arith.mulf %47, %48 : vector<16x1xf32>
    %50 = vector.broadcast %49 : vector<16x1xf32> to vector<16x128xf32>
    %51 = arith.subf %42, %50 : vector<16x128xf32>
    %52 = arith.mulf %51, %51 : vector<16x128xf32>
    %cst_18 = arith.constant dense<0.000000e+00> : vector<16xf32>
    %53 = vector.multi_reduction <add>, %52, %cst_18 [1] : vector<16x128xf32> to vector<16xf32>
    %54 = vector.shape_cast %53 : vector<16xf32> to vector<16x1xf32>
    %55 = arith.mulf %49, %49 : vector<16x1xf32>
    %cst_19 = arith.constant 9.600000e+01 : f32
    %56 = vector.broadcast %cst_19 : f32 to vector<16x1xf32>
    %57 = arith.mulf %56, %55 : vector<16x1xf32>
    %58 = arith.subf %54, %57 : vector<16x1xf32>
    %cst_20 = arith.constant 3.125000e-02 : f32
    %59 = vector.broadcast %cst_20 : f32 to vector<16x1xf32>
    %60 = arith.mulf %58, %59 : vector<16x1xf32>
    %cst_21 = arith.constant 9.99999974E-6 : f32
    %61 = vector.broadcast %cst_21 : f32 to vector<16x1xf32>
    %62 = arith.addf %60, %61 : vector<16x1xf32>
    %63 = math.rsqrt %62 : vector<16x1xf32>
    %64 = vector.broadcast %63 : vector<16x1xf32> to vector<16x128xf32>
    %65 = arith.mulf %51, %64 : vector<16x128xf32>
    %66 = vector.broadcast %43 : vector<1x128xf32> to vector<16x128xf32>
    %67 = arith.mulf %65, %66 : vector<16x128xf32>
    %68 = vector.broadcast %44 : vector<1x128xf32> to vector<16x128xf32>
    %69 = arith.addf %67, %68 : vector<16x128xf32>
    %cst_22 = arith.constant 2.000000e-02 : f32
    %70 = vector.broadcast %cst_22 : f32 to vector<16x128xf32>
    %71 = arith.mulf %70, %69 : vector<16x128xf32>
    %72 = arith.maximumf %69, %71 : vector<16x128xf32>
    %73 = arith.truncf %72 : vector<16x128xf32> to vector<16x128xbf16>
    %c1 = arith.constant 1 : index
    %c0_23 = arith.constant 0 : index
    %c0_24 = arith.constant 0 : index
    %74 = vector.load %arg3[%c1, %c0_23, %c0_24] : memref<3x128x128xbf16, #tpu.memory_space<vmem>>, vector<1x128x128xbf16>
    %75 = vector.shape_cast %74 : vector<1x128x128xbf16> to vector<128x128xbf16>
    %cst_25 = arith.constant dense<0.000000e+00> : vector<16x128xf32>
    %76 = tpu.matmul %73, %75, %cst_25 {dimension_numbers = #tpu.dot_dimension_numbers<[1], [0], [0], [1], [0, 0, 1, 1], [], []>} : vector<16x128xbf16>, vector<128x128xbf16>, vector<16x128xf32> -> vector<16x128xf32>
    %77 = vector.broadcast %45 : vector<1x128xf32> to vector<16x128xf32>
    %78 = arith.addf %76, %77 : vector<16x128xf32>
    %79 = vector.extract_strided_slice %0 {offsets = [7, 0], sizes = [1, 128], strides = [1, 1]} : vector<10x128xf32> to vector<1x128xf32>
    %80 = vector.extract_strided_slice %0 {offsets = [8, 0], sizes = [1, 128], strides = [1, 1]} : vector<10x128xf32> to vector<1x128xf32>
    %81 = vector.extract_strided_slice %0 {offsets = [9, 0], sizes = [1, 128], strides = [1, 1]} : vector<10x128xf32> to vector<1x128xf32>
    %cst_26 = arith.constant dense<0.000000e+00> : vector<16xf32>
    %82 = vector.multi_reduction <add>, %78, %cst_26 [1] : vector<16x128xf32> to vector<16xf32>
    %83 = vector.shape_cast %82 : vector<16xf32> to vector<16x1xf32>
    %cst_27 = arith.constant 3.125000e-02 : f32
    %84 = vector.broadcast %cst_27 : f32 to vector<16x1xf32>
    %85 = arith.mulf %83, %84 : vector<16x1xf32>
    %86 = vector.broadcast %85 : vector<16x1xf32> to vector<16x128xf32>
    %87 = arith.subf %78, %86 : vector<16x128xf32>
    %88 = arith.mulf %87, %87 : vector<16x128xf32>
    %cst_28 = arith.constant dense<0.000000e+00> : vector<16xf32>
    %89 = vector.multi_reduction <add>, %88, %cst_28 [1] : vector<16x128xf32> to vector<16xf32>
    %90 = vector.shape_cast %89 : vector<16xf32> to vector<16x1xf32>
    %91 = arith.mulf %85, %85 : vector<16x1xf32>
    %cst_29 = arith.constant 9.600000e+01 : f32
    %92 = vector.broadcast %cst_29 : f32 to vector<16x1xf32>
    %93 = arith.mulf %92, %91 : vector<16x1xf32>
    %94 = arith.subf %90, %93 : vector<16x1xf32>
    %cst_30 = arith.constant 3.125000e-02 : f32
    %95 = vector.broadcast %cst_30 : f32 to vector<16x1xf32>
    %96 = arith.mulf %94, %95 : vector<16x1xf32>
    %cst_31 = arith.constant 9.99999974E-6 : f32
    %97 = vector.broadcast %cst_31 : f32 to vector<16x1xf32>
    %98 = arith.addf %96, %97 : vector<16x1xf32>
    %99 = math.rsqrt %98 : vector<16x1xf32>
    %100 = vector.broadcast %99 : vector<16x1xf32> to vector<16x128xf32>
    %101 = arith.mulf %87, %100 : vector<16x128xf32>
    %102 = vector.broadcast %79 : vector<1x128xf32> to vector<16x128xf32>
    %103 = arith.mulf %101, %102 : vector<16x128xf32>
    %104 = vector.broadcast %80 : vector<1x128xf32> to vector<16x128xf32>
    %105 = arith.addf %103, %104 : vector<16x128xf32>
    %cst_32 = arith.constant 2.000000e-02 : f32
    %106 = vector.broadcast %cst_32 : f32 to vector<16x128xf32>
    %107 = arith.mulf %106, %105 : vector<16x128xf32>
    %108 = arith.maximumf %105, %107 : vector<16x128xf32>
    %109 = arith.truncf %108 : vector<16x128xf32> to vector<16x128xbf16>
    %c2 = arith.constant 2 : index
    %c0_33 = arith.constant 0 : index
    %c0_34 = arith.constant 0 : index
    %110 = vector.load %arg3[%c2, %c0_33, %c0_34] : memref<3x128x128xbf16, #tpu.memory_space<vmem>>, vector<1x128x128xbf16>
    %111 = vector.shape_cast %110 : vector<1x128x128xbf16> to vector<128x128xbf16>
    %cst_35 = arith.constant dense<0.000000e+00> : vector<16x128xf32>
    %112 = tpu.matmul %109, %111, %cst_35 {dimension_numbers = #tpu.dot_dimension_numbers<[1], [0], [0], [1], [0, 0, 1, 1], [], []>} : vector<16x128xbf16>, vector<128x128xbf16>, vector<16x128xf32> -> vector<16x128xf32>
    %113 = vector.broadcast %81 : vector<1x128xf32> to vector<16x128xf32>
    %114 = arith.addf %112, %113 : vector<16x128xf32>
    %cst_36 = arith.constant 2.000000e-02 : f32
    %115 = vector.broadcast %cst_36 : f32 to vector<16x128xf32>
    %116 = arith.mulf %115, %114 : vector<16x128xf32>
    %117 = arith.maximumf %114, %116 : vector<16x128xf32>
    %118 = arith.truncf %117 : vector<16x128xf32> to vector<16x128xbf16>
    %c0_37 = arith.constant 0 : index
    %c0_38 = arith.constant 0 : index
    %119 = vector.load %arg4[%c0_37, %c0_38] : memref<128x4xbf16, #tpu.memory_space<vmem>>, vector<128x4xbf16>
    %cst_39 = arith.constant dense<0.000000e+00> : vector<16x4xf32>
    %120 = tpu.matmul %118, %119, %cst_39 {dimension_numbers = #tpu.dot_dimension_numbers<[1], [0], [0], [1], [0, 0, 1, 1], [], []>} : vector<16x128xbf16>, vector<128x4xbf16>, vector<16x4xf32> -> vector<16x4xf32>
    %c0_40 = arith.constant 0 : index
    %c0_41 = arith.constant 0 : index
    %121 = vector.load %arg6[%c0_40, %c0_41] : memref<1x4xf32, #tpu.memory_space<vmem>>, vector<1x4xf32>
    %122 = vector.broadcast %121 : vector<1x4xf32> to vector<16x4xf32>
    %123 = arith.addf %120, %122 : vector<16x4xf32>
    %c0_42 = arith.constant 0 : index
    %c0_43 = arith.constant 0 : index
    %124 = vector.load %arg7[%c0_42, %c0_43] : memref<16x4xf32, #tpu.memory_space<vmem>>, vector<16x4xf32>
    tpu.vector_store %arg7[%c0_42, %c0_43], %123 {strides = array<i32>} : memref<16x4xf32, #tpu.memory_space<vmem>>, vector<16x4xf32>,
    return
  }
  func.func @transform_0(%arg0: i32) -> (i32, i32) {
    %c0_i32 = arith.constant 0 : i32
    %c0_i32_0 = arith.constant 0 : i32
    return %arg0, %c0_i32 : i32, i32
  }
  func.func @transform_1(%arg0: i32) -> (i32, i32) {
    %c0_i32 = arith.constant 0 : i32
    %c0_i32_0 = arith.constant 0 : i32
    %c0_i32_1 = arith.constant 0 : i32
    return %c0_i32, %c0_i32_0 : i32, i32
  }
  func.func @transform_2(%arg0: i32) -> (i32, i32, i32) {
    %c0_i32 = arith.constant 0 : i32
    %c0_i32_0 = arith.constant 0 : i32
    %c0_i32_1 = arith.constant 0 : i32
    %c0_i32_2 = arith.constant 0 : i32
    return %c0_i32, %c0_i32_0, %c0_i32_1 : i32, i32, i32
  }
  func.func @transform_3(%arg0: i32) -> (i32, i32) {
    %c0_i32 = arith.constant 0 : i32
    %c0_i32_0 = arith.constant 0 : i32
    %c0_i32_1 = arith.constant 0 : i32
    return %c0_i32, %c0_i32_0 : i32, i32
  }
  func.func @transform_4(%arg0: i32) -> (i32, i32) {
    %c0_i32 = arith.constant 0 : i32
    %c0_i32_0 = arith.constant 0 : i32
    %c0_i32_1 = arith.constant 0 : i32
    return %c0_i32, %c0_i32_0 : i32, i32
  }
  func.func @transform_5(%arg0: i32) -> (i32, i32) {
    %c0_i32 = arith.constant 0 : i32
    %c0_i32_0 = arith.constant 0 : i32
    %c0_i32_1 = arith.constant 0 : i32
    return %c0_i32, %c0_i32_0 : i32, i32
  }
  func.func @transform_6(%arg0: i32) -> (i32, i32) {
    %c0_i32 = arith.constant 0 : i32
    %c0_i32_0 = arith.constant 0 : i32
    return %arg0, %c0_i32 : i32, i32
  }
}

</mosaic_0001>

<llo_original>
// kernel: tpu_custom_call.1
$region0: #{tpu_custom_call.1}
  #allocation0 [shape = 'u32[]', space=smem, size = 0x4, offset = 0x4, fixed_abs, tag = 'smem constant byte address 0x4 - core index']
  #allocation1 [shape = 'u32[72,128]{1,0:T(1,128)}', space=vmem, size = 0x9000, scoped, tag = 'internal scratch']
  %s0 = inlined_call_operand.vmem [shape: bf16[16,4], index: 0, kind: input, shape index: {}]
  %s1 = inlined_call_operand.vmem [shape: bf16[4,128], index: 1, kind: input, shape index: {}]
  %s2 = inlined_call_operand.hbm [shape: bf16[3,128,128], index: 2, kind: input, shape index: {}]
  %s3 = inlined_call_operand.vmem [shape: bf16[128,4], index: 3, kind: input, shape index: {}]
  %s4 = inlined_call_operand.vmem [shape: f32[10,128], index: 4, kind: input, shape index: {}]
  %s5 = inlined_call_operand.vmem [shape: f32[1,4], index: 5, kind: input, shape index: {}]
  %s6 = inlined_call_operand.vmem [shape: f32[16,4], index: 6, kind: output, shape index: {}]
  %s7 = sld [smem:[#allocation0]]
  $region38: #{tpu_custom_call.1} parent=0
    _
  %s9 = ssub.s32 1, %s7
  %s10 = scalar_select 0, %s9, %s7
  $region1: #{tpu_custom_call.1} parent=0
    #allocation2 [shape = 'u8[98304]{0}', space=vmem, size = 0x18000, scoped, tag = 'input window, operand 2, single buffered']
    #allocation3 [shape = 's32[1]{0}', space=sflag, size = 0x4, scoped, tag = 'scoped memory for tpu_custom_call.1']
    %11 = vsyncpa [#allocation3], 0
    // Predicated region
    $region2: #{tpu_custom_call.1} parent=1 // pred_check
      _
    $region3: #{tpu_custom_call.1} parent=1 // pred_check_branch
      %13 = sbr.rel (0) target = $region5
    $region4: #{tpu_custom_call.1} parent=1 // pred_region
      _
    $region5: #{tpu_custom_call.1} parent=1 // pred_fallthru
      _
    // Predicated region
    $region6: #{tpu_custom_call.1} parent=1 // pred_check
      _
    $region7: #{tpu_custom_call.1} parent=1 // pred_check_branch
      %15 = sbr.rel (0) target = $region9
    $region8: #{tpu_custom_call.1} parent=1 // pred_region
      _
    $region9: #{tpu_custom_call.1} parent=1 // pred_fallthru
      _
    // Predicated region
    $region10: #{tpu_custom_call.1} parent=1 // pred_check
      _
    $region11: #{tpu_custom_call.1} parent=1 // pred_check_branch
      %17 = sbr.rel (0) target = $region13
    $region12: #{tpu_custom_call.1} parent=1 // pred_region
      %19 = vsyncadd [#allocation3], 0
      %s20 = sshll.u32 %s2, 4
      %s21 = int_to_ptr.hbm [resolvable:$true] %s20
      %s22 = sshll.u32 [#allocation2], 4
      %s23 = int_to_ptr.vmem [resolvable:$true] %s22
      %28 = dma.hbm_to_vmem [thread:$0]  %s21, 3072, %s23, [#allocation3], 64, 64, 4
    $region13: #{tpu_custom_call.1} parent=1 // pred_fallthru
      _
    // Predicated region
    $region14: #{tpu_custom_call.1} parent=1 // pred_check
      _
    $region15: #{tpu_custom_call.1} parent=1 // pred_check_branch
      %30 = sbr.rel (0) target = $region17
    $region16: #{tpu_custom_call.1} parent=1 // pred_region
      _
    $region17: #{tpu_custom_call.1} parent=1 // pred_fallthru
      _
    // Predicated region
    $region18: #{tpu_custom_call.1} parent=1 // pred_check
      _
    $region19: #{tpu_custom_call.1} parent=1 // pred_check_branch
      %32 = sbr.rel (0) target = $region21
    $region20: #{tpu_custom_call.1} parent=1 // pred_region
      _
    $region21: #{tpu_custom_call.1} parent=1 // pred_fallthru
      _
    // Predicated region
    $region22: #{tpu_custom_call.1} parent=1 // pred_check
      _
    $region23: #{tpu_custom_call.1} parent=1 // pred_check_branch
      %34 = sbr.rel (0) target = $region25
    $region24: #{tpu_custom_call.1} parent=1 // pred_region
      _
    $region25: #{tpu_custom_call.1} parent=1 // pred_fallthru
      _
    // Predicated region
    $region26: #{tpu_custom_call.1} parent=1 // pred_check
      _
    $region27: #{tpu_custom_call.1} parent=1 // pred_check_branch
      %36 = sbr.rel (0) target = $region29
    $region28: #{tpu_custom_call.1} parent=1 // pred_region
      %38 = dma.done [#allocation3], 3072
    $region29: #{tpu_custom_call.1} parent=1 // pred_fallthru
      _
    %v40 = vld [vmem:[%s4] sm:$0xff]
    %v41 = vld [vmem:[%s4 + $0x8] sm:$0x3]
    %v42 = vld [vmem:[%s0] sm:$0xf]
    %v43 = vld [vmem:[%s0 + $0x4] sm:$0xf]
    %v44 = vld [vmem:[%s1] sm:$0x3]
    %v45 = vperm.slane %v40, 0
    %v48 = vunpack.c.l.b16 %v42
    %v49 = vunpack.c.l.b16 %v43
    %v50 = vpack.c.b16 %v49, %v48
    %vm51 = vcmask 31744
    %v53 = vsel %vm51, %v50, 0
    %vm55 = vcmask 1041408
    %v57 = vsel %vm55, %v44, 0
    %59 = vmatpush.bf16.msra.mxu0 0
    %60 = vmatpush.bf16.msra.mxu0 0
    %61 = vmatpush.bf16.msra.mxu0 0
    %62 = vmatpush.bf16.msra.mxu0 0
    %63 = vmatpush.bf16.msra.mxu0 0
    %64 = vmatpush.bf16.msra.mxu0 0
    %65 = vmatpush.bf16.msra.mxu0 0
    %66 = vmatpush.bf16.msra.mxu0 %v57
    %67 = vmatmul.bf16.gmra.mxu0 %v53
    %v68 = vpop.f32.mrf.mxu0
    %v69 = vadd.f32 %v45, %v68
    %v70 = vpop.f32.mrf.mxu0
    %v71 = vadd.f32 %v45, %v70
    %72 = vdwg.mxu0
    %73 = vadd.xlane.f32.xlu0 %v69
    %v74 = vpop.xlane.xlu0 %73
    %75 = vadd.xlane.f32.xlu0 %v71
    %v76 = vpop.xlane.xlu0 %75
    %v77 = vmul.f32 %v74, 0.03125
    %v78 = vmul.f32 %v76, 0.03125
    %v79 = vsub.f32 %v69, %v77
    %v80 = vsub.f32 %v71, %v78
    %v81 = vmul.f32 %v79, %v79
    %v82 = vmul.f32 %v80, %v80
    %83 = vadd.xlane.f32.xlu0 %v81
    %v84 = vpop.xlane.xlu0 %83
    %85 = vadd.xlane.f32.xlu0 %v82
    %v86 = vpop.xlane.xlu0 %85
    %v87 = vmul.f32 %v77, %v77
    %v88 = vmul.f32 %v78, %v78
    %v89 = vmul.f32 %v87, 96.0
    %v90 = vmul.f32 %v88, 96.0
    %v91 = vsub.f32 %v84, %v89
    %v92 = vsub.f32 %v86, %v90
    %v93 = vmul.f32 %v91, 0.03125
    %v94 = vmul.f32 %v92, 0.03125
    %v95 = vadd.f32 %v93, 1e-05
    %v96 = vadd.f32 %v94, 1e-05
    %v97 = vrsqrt.pop %v95
    %v98 = vmul.f32 %v97, %v95
    %v99 = vmul.f32 %v98, %v97
    %v100 = vmul.f32 0.5, %v99
    %v101 = vsub.f32 1.5, %v100
    %v102 = vmul.f32 %v97, %v101
    %vm103 = vweird.f32 %v95
    %vm104 = vweird.f32 %v97
    %vm105 = vmor %vm103, %vm104
    %v106 = vsel %vm105, %v97, %v102
    %v107 = vrsqrt.pop %v96
    %v108 = vmul.f32 %v107, %v96
    %v109 = vmul.f32 %v108, %v107
    %v110 = vmul.f32 0.5, %v109
    %v111 = vsub.f32 1.5, %v110
    %v112 = vmul.f32 %v107, %v111
    %vm113 = vweird.f32 %v96
    %vm114 = vweird.f32 %v107
    %vm115 = vmor %vm113, %vm114
    %v116 = vsel %vm115, %v107, %v112
    %v117 = vmul.f32 %v79, %v106
    %v118 = vmul.f32 %v80, %v116
    %v119 = vperm.slane %v40, 1
    %v120 = vmul.f32 %v117, %v119
    %v121 = vmul.f32 %v118, %v119
    %v122 = vperm.slane %v40, 2
    %v123 = vadd.f32 %v120, %v122
    %v124 = vadd.f32 %v121, %v122
    %v125 = vmul.f32 %v123, 0.02
    %v126 = vmul.f32 %v124, 0.02
    %v127 = vmax.f32 %v123, %v125
    %v128 = vmax.f32 %v124, %v126
    %v129 = vpack.c.bf16 %v128, %v127
    %v130 = vld [vmem:[#allocation2] sm:$0xf]
    %v131 = vld [vmem:[#allocation2 + $0x4] sm:$0xf]
    %v132 = vld [vmem:[#allocation2 + $0x8] sm:$0xf]
    %v133 = vld [vmem:[#allocation2 + $0xc] sm:$0xf]
    %v134 = vld [vmem:[#allocation2 + $0x10] sm:$0xf]
    %v135 = vld [vmem:[#allocation2 + $0x14] sm:$0xf]
    %v136 = vld [vmem:[#allocation2 + $0x18] sm:$0xf]
    %v137 = vld [vmem:[#allocation2 + $0x1c] sm:$0xf]
    %v138 = vld [vmem:[#allocation2 + $0x20] sm:$0xf]
    %v139 = vld [vmem:[#allocation2 + $0x24] sm:$0xf]
    %v140 = vld [vmem:[#allocation2 + $0x28] sm:$0xf]
    %v141 = vld [vmem:[#allocation2 + $0x2c] sm:$0xf]
    %v142 = vld [vmem:[#allocation2 + $0x30] sm:$0xf]
    %v143 = vld [vmem:[#allocation2 + $0x34] sm:$0xf]
    %v144 = vld [vmem:[#allocation2 + $0x38] sm:$0xf]
    %v145 = vld [vmem:[#allocation2 + $0x3c] sm:$0xf]
    %v146 = vperm.slane %v40, 3
    %v163 = vunpack.c.l.b16 %v130
    %v164 = vunpack.c.l.b16 %v131
    %v165 = vunpack.c.l.b16 %v132
    %v166 = vunpack.c.l.b16 %v133
    %v167 = vunpack.c.l.b16 %v134
    %v168 = vunpack.c.l.b16 %v135
    %v169 = vunpack.c.l.b16 %v136
    %v170 = vunpack.c.l.b16 %v137
    %v171 = vunpack.c.l.b16 %v138
    %v172 = vunpack.c.l.b16 %v139
    %v173 = vunpack.c.l.b16 %v140
    %v174 = vunpack.c.l.b16 %v141
    %v175 = vunpack.c.l.b16 %v142
    %v176 = vunpack.c.l.b16 %v143
    %v177 = vunpack.c.l.b16 %v144
    %v178 = vunpack.c.l.b16 %v145
    %v179 = vpack.c.b16 %v164, %v163
    %v180 = vpack.c.b16 %v166, %v165
    %v181 = vpack.c.b16 %v168, %v167
    %v182 = vpack.c.b16 %v170, %v169
    %v183 = vpack.c.b16 %v172, %v171
    %v184 = vpack.c.b16 %v174, %v173
    %v185 = vpack.c.b16 %v176, %v175
    %v186 = vpack.c.b16 %v178, %v177
    %195 = vmatpush.bf16.msra.mxu0 %v186
    %196 = vmatpush.bf16.msra.mxu0 %v185
    %197 = vmatpush.bf16.msra.mxu0 %v184
    %198 = vmatpush.bf16.msra.mxu0 %v183
    %199 = vmatpush.bf16.msra.mxu0 %v182
    %200 = vmatpush.bf16.msra.mxu0 %v181
    %201 = vmatpush.bf16.msra.mxu0 %v180
    %202 = vmatpush.bf16.msra.mxu0 %v179
    %203 = vmatmul.bf16.gmra.mxu0 %v129
    %v204 = vpop.f32.mrf.mxu0
    %v205 = vadd.f32 %v146, %v204
    %v206 = vpop.f32.mrf.mxu0
    %v207 = vadd.f32 %v146, %v206
    %208 = vdwg.mxu0
    %209 = vadd.xlane.f32.xlu0 %v205
    %v210 = vpop.xlane.xlu0 %209
    %211 = vadd.xlane.f32.xlu0 %v207
    %v212 = vpop.xlane.xlu0 %211
    %v213 = vmul.f32 %v210, 0.03125
    %v214 = vmul.f32 %v212, 0.03125
    %v215 = vsub.f32 %v205, %v213
    %v216 = vsub.f32 %v207, %v214
    %v217 = vmul.f32 %v215, %v215
    %v218 = vmul.f32 %v216, %v216
    %219 = vadd.xlane.f32.xlu0 %v217
    %v220 = vpop.xlane.xlu0 %219
    %221 = vadd.xlane.f32.xlu0 %v218
    %v222 = vpop.xlane.xlu0 %221
    %v223 = vmul.f32 %v213, %v213
    %v224 = vmul.f32 %v214, %v214
    %v225 = vmul.f32 %v223, 96.0
    %v226 = vmul.f32 %v224, 96.0
    %v227 = vsub.f32 %v220, %v225
    %v228 = vsub.f32 %v222, %v226
    %v229 = vmul.f32 %v227, 0.03125
    %v230 = vmul.f32 %v228, 0.03125
    %v231 = vadd.f32 %v229, 1e-05
    %v232 = vadd.f32 %v230, 1e-05
    %v233 = vrsqrt.pop %v231
    %v234 = vmul.f32 %v233, %v231
    %v235 = vmul.f32 %v234, %v233
    %v236 = vmul.f32 0.5, %v235
    %v237 = vsub.f32 1.5, %v236
    %v238 = vmul.f32 %v233, %v237
    %vm239 = vweird.f32 %v231
    %vm240 = vweird.f32 %v233
    %vm241 = vmor %vm239, %vm240
    %v242 = vsel %vm241, %v233, %v238
    %v243 = vrsqrt.pop %v232
    %v244 = vmul.f32 %v243, %v232
    %v245 = vmul.f32 %v244, %v243
    %v246 = vmul.f32 0.5, %v245
    %v247 = vsub.f32 1.5, %v246
    %v248 = vmul.f32 %v243, %v247
    %vm249 = vweird.f32 %v232
    %vm250 = vweird.f32 %v243
    %vm251 = vmor %vm249, %vm250
    %v252 = vsel %vm251, %v243, %v248
    %v253 = vmul.f32 %v215, %v242
    %v254 = vmul.f32 %v216, %v252
    %v255 = vperm.slane %v40, 4
    %v256 = vmul.f32 %v253, %v255
    %v257 = vmul.f32 %v254, %v255
    %v258 = vperm.slane %v40, 5
    %v259 = vadd.f32 %v256, %v258
    %v260 = vadd.f32 %v257, %v258
    %v261 = vmul.f32 %v259, 0.02
    %v262 = vmul.f32 %v260, 0.02
    %v263 = vmax.f32 %v259, %v261
    %v264 = vmax.f32 %v260, %v262
    %v265 = vpack.c.bf16 %v264, %v263
    %s266 = scalar_lea.vmem [#allocation2], 64
    %v267 = vld [vmem:[%s266] sm:$0xf]
    %v268 = vld [vmem:[%s266 + $0x4] sm:$0xf]
    %v269 = vld [vmem:[%s266 + $0x8] sm:$0xf]
    %v270 = vld [vmem:[%s266 + $0xc] sm:$0xf]
    %v271 = vld [vmem:[%s266 + $0x10] sm:$0xf]
    %v272 = vld [vmem:[%s266 + $0x14] sm:$0xf]
    %v273 = vld [vmem:[%s266 + $0x18] sm:$0xf]
    %v274 = vld [vmem:[%s266 + $0x1c] sm:$0xf]
    %v275 = vld [vmem:[%s266 + $0x20] sm:$0xf]
    %v276 = vld [vmem:[%s266 + $0x24] sm:$0xf]
    %v277 = vld [vmem:[%s266 + $0x28] sm:$0xf]
    %v278 = vld [vmem:[%s266 + $0x2c] sm:$0xf]
    %v279 = vld [vmem:[%s266 + $0x30] sm:$0xf]
    %v280 = vld [vmem:[%s266 + $0x34] sm:$0xf]
    %v281 = vld [vmem:[%s266 + $0x38] sm:$0xf]
    %v282 = vld [vmem:[%s266 + $0x3c] sm:$0xf]
    %v283 = vperm.slane %v40, 6
    %v300 = vunpack.c.l.b16 %v267
    %v301 = vunpack.c.l.b16 %v268
    %v302 = vunpack.c.l.b16 %v269
    %v303 = vunpack.c.l.b16 %v270
    %v304 = vunpack.c.l.b16 %v271
    %v305 = vunpack.c.l.b16 %v272
    %v306 = vunpack.c.l.b16 %v273
    %v307 = vunpack.c.l.b16 %v274
    %v308 = vunpack.c.l.b16 %v275
    %v309 = vunpack.c.l.b16 %v276
    %v310 = vunpack.c.l.b16 %v277
    %v311 = vunpack.c.l.b16 %v278
    %v312 = vunpack.c.l.b16 %v279
    %v313 = vunpack.c.l.b16 %v280
    %v314 = vunpack.c.l.b16 %v281
    %v315 = vunpack.c.l.b16 %v282
    %v316 = vpack.c.b16 %v301, %v300
    %v317 = vpack.c.b16 %v303, %v302
    %v318 = vpack.c.b16 %v305, %v304
    %v319 = vpack.c.b16 %v307, %v306
    %v320 = vpack.c.b16 %v309, %v308
    %v321 = vpack.c.b16 %v311, %v310
    %v322 = vpack.c.b16 %v313, %v312
    %v323 = vpack.c.b16 %v315, %v314
    %332 = vmatpush.bf16.msra.mxu0 %v323
    %333 = vmatpush.bf16.msra.mxu0 %v322
    %334 = vmatpush.bf16.msra.mxu0 %v321
    %335 = vmatpush.bf16.msra.mxu0 %v320
    %336 = vmatpush.bf16.msra.mxu0 %v319
    %337 = vmatpush.bf16.msra.mxu0 %v318
    %338 = vmatpush.bf16.msra.mxu0 %v317
    %339 = vmatpush.bf16.msra.mxu0 %v316
    %340 = vmatmul.bf16.gmra.mxu0 %v265
    %v341 = vpop.f32.mrf.mxu0
    %v342 = vadd.f32 %v283, %v341
    %v343 = vpop.f32.mrf.mxu0
    %v344 = vadd.f32 %v283, %v343
    %345 = vdwg.mxu0
    %346 = vadd.xlane.f32.xlu0 %v342
    %v347 = vpop.xlane.xlu0 %346
    %348 = vadd.xlane.f32.xlu0 %v344
    %v349 = vpop.xlane.xlu0 %348
    %v350 = vmul.f32 %v347, 0.03125
    %v351 = vmul.f32 %v349, 0.03125
    %v352 = vsub.f32 %v342, %v350
    %v353 = vsub.f32 %v344, %v351
    %v354 = vmul.f32 %v352, %v352
    %v355 = vmul.f32 %v353, %v353
    %356 = vadd.xlane.f32.xlu0 %v354
    %v357 = vpop.xlane.xlu0 %356
    %358 = vadd.xlane.f32.xlu0 %v355
    %v359 = vpop.xlane.xlu0 %358
    %v360 = vmul.f32 %v350, %v350
    %v361 = vmul.f32 %v351, %v351
    %v362 = vmul.f32 %v360, 96.0
    %v363 = vmul.f32 %v361, 96.0
    %v364 = vsub.f32 %v357, %v362
    %v365 = vsub.f32 %v359, %v363
    %v366 = vmul.f32 %v364, 0.03125
    %v367 = vmul.f32 %v365, 0.03125
    %v368 = vadd.f32 %v366, 1e-05
    %v369 = vadd.f32 %v367, 1e-05
    %v370 = vrsqrt.pop %v368
    %v371 = vmul.f32 %v370, %v368
    %v372 = vmul.f32 %v371, %v370
    %v373 = vmul.f32 0.5, %v372
    %v374 = vsub.f32 1.5, %v373
    %v375 = vmul.f32 %v370, %v374
    %vm376 = vweird.f32 %v368
    %vm377 = vweird.f32 %v370
    %vm378 = vmor %vm376, %vm377
    %v379 = vsel %vm378, %v370, %v375
    %v380 = vrsqrt.pop %v369
    %v381 = vmul.f32 %v380, %v369
    %v382 = vmul.f32 %v381, %v380
    %v383 = vmul.f32 0.5, %v382
    %v384 = vsub.f32 1.5, %v383
    %v385 = vmul.f32 %v380, %v384
    %vm386 = vweird.f32 %v369
    %vm387 = vweird.f32 %v380
    %vm388 = vmor %vm386, %vm387
    %v389 = vsel %vm388, %v380, %v385
    %v390 = vmul.f32 %v352, %v379
    %v391 = vmul.f32 %v353, %v389
    %v392 = vperm.slane %v40, 7
    %v393 = vmul.f32 %v390, %v392
    %v394 = vmul.f32 %v391, %v392
    %v395 = vperm.slane %v41, 0
    %v396 = vadd.f32 %v393, %v395
    %v397 = vadd.f32 %v394, %v395
    %v398 = vmul.f32 %v396, 0.02
    %v399 = vmul.f32 %v397, 0.02
    %v400 = vmax.f32 %v396, %v398
    %v401 = vmax.f32 %v397, %v399
    %v402 = vpack.c.bf16 %v401, %v400
    %s403 = scalar_lea.vmem [#allocation2], 128
    %v404 = vld [vmem:[%s403] sm:$0xf]
    %v405 = vld [vmem:[%s403 + $0x4] sm:$0xf]
    %v406 = vld [vmem:[%s403 + $0x8] sm:$0xf]
    %v407 = vld [vmem:[%s403 + $0xc] sm:$0xf]
    %v408 = vld [vmem:[%s403 + $0x10] sm:$0xf]
    %v409 = vld [vmem:[%s403 + $0x14] sm:$0xf]
    %v410 = vld [vmem:[%s403 + $0x18] sm:$0xf]
    %v411 = vld [vmem:[%s403 + $0x1c] sm:$0xf]
    %v412 = vld [vmem:[%s403 + $0x20] sm:$0xf]
    %v413 = vld [vmem:[%s403 + $0x24] sm:$0xf]
    %v414 = vld [vmem:[%s403 + $0x28] sm:$0xf]
    %v415 = vld [vmem:[%s403 + $0x2c] sm:$0xf]
    %v416 = vld [vmem:[%s403 + $0x30] sm:$0xf]
    %v417 = vld [vmem:[%s403 + $0x34] sm:$0xf]
    %v418 = vld [vmem:[%s403 + $0x38] sm:$0xf]
    %v419 = vld [vmem:[%s403 + $0x3c] sm:$0xf]
    %v420 = vperm.slane %v41, 1
    %v437 = vunpack.c.l.b16 %v404
    %v438 = vunpack.c.l.b16 %v405
    %v439 = vunpack.c.l.b16 %v406
    %v440 = vunpack.c.l.b16 %v407
    %v441 = vunpack.c.l.b16 %v408
    %v442 = vunpack.c.l.b16 %v409
    %v443 = vunpack.c.l.b16 %v410
    %v444 = vunpack.c.l.b16 %v411
    %v445 = vunpack.c.l.b16 %v412
    %v446 = vunpack.c.l.b16 %v413
    %v447 = vunpack.c.l.b16 %v414
    %v448 = vunpack.c.l.b16 %v415
    %v449 = vunpack.c.l.b16 %v416
    %v450 = vunpack.c.l.b16 %v417
    %v451 = vunpack.c.l.b16 %v418
    %v452 = vunpack.c.l.b16 %v419
    %v453 = vpack.c.b16 %v438, %v437
    %v454 = vpack.c.b16 %v440, %v439
    %v455 = vpack.c.b16 %v442, %v441
    %v456 = vpack.c.b16 %v444, %v443
    %v457 = vpack.c.b16 %v446, %v445
    %v458 = vpack.c.b16 %v448, %v447
    %v459 = vpack.c.b16 %v450, %v449
    %v460 = vpack.c.b16 %v452, %v451
    %469 = vmatpush.bf16.msra.mxu0 %v460
    %470 = vmatpush.bf16.msra.mxu0 %v459
    %471 = vmatpush.bf16.msra.mxu0 %v458
    %472 = vmatpush.bf16.msra.mxu0 %v457
    %473 = vmatpush.bf16.msra.mxu0 %v456
    %474 = vmatpush.bf16.msra.mxu0 %v455
    %475 = vmatpush.bf16.msra.mxu0 %v454
    %476 = vmatpush.bf16.msra.mxu0 %v453
    %477 = vmatmul.bf16.gmra.mxu0 %v402
    %v478 = vpop.f32.mrf.mxu0
    %v479 = vadd.f32 %v420, %v478
    %v480 = vpop.f32.mrf.mxu0
    %v481 = vadd.f32 %v420, %v480
    %482 = vdwg.mxu0
    %v483 = vmul.f32 %v479, 0.02
    %v484 = vmul.f32 %v481, 0.02
    %v485 = vmax.f32 %v479, %v483
    %v486 = vmax.f32 %v481, %v484
    %v487 = vpack.c.bf16 %v486, %v485
    %v488 = vld [vmem:[%s3] sm:$0xf]
    %v489 = vld [vmem:[%s3 + $0x4] sm:$0xf]
    %v490 = vld [vmem:[%s3 + $0x8] sm:$0xf]
    %v491 = vld [vmem:[%s3 + $0xc] sm:$0xf]
    %v492 = vld [vmem:[%s3 + $0x10] sm:$0xf]
    %v493 = vld [vmem:[%s3 + $0x14] sm:$0xf]
    %v494 = vld [vmem:[%s3 + $0x18] sm:$0xf]
    %v495 = vld [vmem:[%s3 + $0x1c] sm:$0xf]
    %v496 = vld [vmem:[%s3 + $0x20] sm:$0xf]
    %v497 = vld [vmem:[%s3 + $0x24] sm:$0xf]
    %v498 = vld [vmem:[%s3 + $0x28] sm:$0xf]
    %v499 = vld [vmem:[%s3 + $0x2c] sm:$0xf]
    %v500 = vld [vmem:[%s3 + $0x30] sm:$0xf]
    %v501 = vld [vmem:[%s3 + $0x34] sm:$0xf]
    %v502 = vld [vmem:[%s3 + $0x38] sm:$0xf]
    %v503 = vld [vmem:[%s3 + $0x3c] sm:$0xf]
    %v504 = vld [vmem:[%s5] sm:$0x1]
    %v506 = vperm.slane %v504, 0
    %v524 = vunpack.c.l.b16 %v488
    %v525 = vunpack.c.l.b16 %v489
    %v526 = vunpack.c.l.b16 %v490
    %v527 = vunpack.c.l.b16 %v491
    %v528 = vunpack.c.l.b16 %v492
    %v529 = vunpack.c.l.b16 %v493
    %v530 = vunpack.c.l.b16 %v494
    %v531 = vunpack.c.l.b16 %v495
    %v532 = vunpack.c.l.b16 %v496
    %v533 = vunpack.c.l.b16 %v497
    %v534 = vunpack.c.l.b16 %v498
    %v535 = vunpack.c.l.b16 %v499
    %v536 = vunpack.c.l.b16 %v500
    %v537 = vunpack.c.l.b16 %v501
    %v538 = vunpack.c.l.b16 %v502
    %v539 = vunpack.c.l.b16 %v503
    %v540 = vpack.c.b16 %v525, %v524
    %v541 = vpack.c.b16 %v527, %v526
    %v542 = vpack.c.b16 %v529, %v528
    %v543 = vpack.c.b16 %v531, %v530
    %v544 = vpack.c.b16 %v533, %v532
    %v545 = vpack.c.b16 %v535, %v534
    %v546 = vpack.c.b16 %v537, %v536
    %v547 = vpack.c.b16 %v539, %v538
    %556 = vmatpush.bf16.msra.mxu0 %v547
    %557 = vmatpush.bf16.msra.mxu0 %v546
    %558 = vmatpush.bf16.msra.mxu0 %v545
    %559 = vmatpush.bf16.msra.mxu0 %v544
    %560 = vmatpush.bf16.msra.mxu0 %v543
    %561 = vmatpush.bf16.msra.mxu0 %v542
    %562 = vmatpush.bf16.msra.mxu0 %v541
    %563 = vmatpush.bf16.msra.mxu0 %v540
    %564 = vmatmul.bf16.gmra.mxu0 %v487
    %v565 = vpop.f32.mrf.mxu0
    %v566 = vadd.f32 %v506, %v565
    %v567 = vpop.f32.mrf.mxu0
    %v568 = vadd.f32 %v506, %v567
    %569 = vdwg.mxu0
    %570 = vst.msk [vmem:[%s6] sm:$0xff] %vm51, %v566
    %571 = vst.msk [vmem:[%s6 + $0x8] sm:$0xff] %vm51, %v568
    // Predicated region
    $region30: #{tpu_custom_call.1} parent=1 // pred_check
      _
    $region31: #{tpu_custom_call.1} parent=1 // pred_check_branch
      %573 = sbr.rel (0) target = $region33
    $region32: #{tpu_custom_call.1} parent=1 // pred_region
      _
    $region33: #{tpu_custom_call.1} parent=1 // pred_fallthru
      _
    // Predicated region
    $region34: #{tpu_custom_call.1} parent=1 // pred_check
      _
    $region35: #{tpu_custom_call.1} parent=1 // pred_check_branch
      %575 = sbr.rel (0) target = $region37
    $region36: #{tpu_custom_call.1} parent=1 // pred_region
      _
    $region37: #{tpu_custom_call.1} parent=1 // pred_fallthru
      _
    %576 = vsyncpa [#allocation3], 1

</llo_original>
